<compile_context>
chip_gen: v7x
topology: tpu7x:2x2x1
jax: 0.10.0
libtpu: 0.0.40
codegen_flags: <defaults>
</compile_context>

<pallas_src>
import jax
import jax.numpy as jnp
from jax import lax
from jax.experimental import pallas as pl
from jax.experimental.pallas import tpu as pltpu


def _fused_linear2_kernel(x_ref, w1t_ref, b1_ref, w2t_ref, b2_ref, o_ref):
    # x_ref  : (M, K)    f32 input
    # w1t_ref: (K, N1)   layer-1 weight, already transposed to (in, out)
    # b1_ref : (1, N1)   layer-1 bias
    # w2t_ref: (N1, N2)  layer-2 weight, already transposed
    # b2_ref : (1, N2)   layer-2 bias
    # o_ref  : (M, N2)
    x = x_ref[...]

    # Layer 1: bf16 MXU operands, f32 accumulation, canonical (K,N) contraction.
    h = lax.dot_general(
        x.astype(jnp.bfloat16),
        w1t_ref[...].astype(jnp.bfloat16),
        dimension_numbers=(((1,), (0,)), ((), ())),
        preferred_element_type=jnp.float32,
    )
    h = h + b1_ref[...]          # f32 VPU add; (1, N1) broadcasts over rows
                                 # (== bias.unsqueeze(0).expand_as(output))

    # Layer 2.
    y = lax.dot_general(
        h.astype(jnp.bfloat16),
        w2t_ref[...].astype(jnp.bfloat16),
        dimension_numbers=(((1,), (0,)), ((), ())),
        preferred_element_type=jnp.float32,
    )
    y = y + b2_ref[...]          # f32 VPU add

    o_ref[...] = y.astype(o_ref.dtype)


@jax.jit
def fused_mlp_pallas(x, w1t, b1_2d, w2t, b2_2d):
    """out = (x @ w1t + b1) @ w2t + b2 in one gridless Pallas TPU kernel.

    All operands are passed unpadded and live whole-array in VMEM; weights are
    expected pre-transposed to (in, out) and biases pre-shaped to (1, out).
    """
    M, K = x.shape
    K1, N1 = w1t.shape
    N1b, N2 = w2t.shape
    assert K == K1 and N1 == N1b
    assert b1_2d.shape == (1, N1) and b2_2d.shape == (1, N2)

    vmem_spec = pl.BlockSpec(memory_space=pltpu.MemorySpace.VMEM)
    return pl.pallas_call(
        _fused_linear2_kernel,
        out_shape=jax.ShapeDtypeStruct((M, N2), jnp.float32),
        in_specs=[vmem_spec, vmem_spec, vmem_spec, vmem_spec, vmem_spec],
        out_specs=vmem_spec,
    )(x, w1t, b1_2d, w2t, b2_2d)
    # TODO(synk): at real (large) Linear sizes, switch to a tiled grid:
    #   - tm=tn>=256 (v6e/v7x 2x256^2 MXU), tk 512-1024 in bf16; 128-wide on v5e.
    #   - f32 accumulator in VMEM scratch with pl.when init/finalize over a K axis.
    #   - dimension_semantics=("parallel","parallel","arbitrary") so M/N shard
    #     across v7x's 2 TensorCores.
    #   - explicit pltpu.CompilerParams(vmem_limit_bytes=...) budgeted for v7x's
    #     64 MiB VMEM; tile the hidden dim (un-fuse) if the (tm, N1) intermediate
    #     plus resident w2 does not fit.
    #   - batch many small inputs into one call (grid over M blocks) instead of
    #     one launch per 32-row input.


def init_linear_params(key, in_features, out_features):
    """Mirror Linear.__init__: weight (out, in) ~ U(-0.1, 0.1), bias (out,) ~ U(-0.1, 0.1)."""
    kw, kb = jax.random.split(key)
    weight = jax.random.uniform(kw, (out_features, in_features),
                                minval=-0.1, maxval=0.1, dtype=jnp.float32)
    bias = jax.random.uniform(kb, (out_features,),
                              minval=-0.1, maxval=0.1, dtype=jnp.float32)
    return weight, bias


if __name__ == "__main__":
    key = jax.random.PRNGKey(0)
    k_in, k1, k2 = jax.random.split(key, 3)

    # input = torch.randn(32, 12)
    x = jax.random.normal(k_in, (32, 12), dtype=jnp.float32)

    # linear1 = Linear(12, 24); linear2 = Linear(24, 10)
    w1, b1 = init_linear_params(k1, 12, 24)
    w2, b2 = init_linear_params(k2, 24, 10)

    # One-time weight/bias re-layout OUTSIDE the per-call (jitted) path:
    # canonical (K, N) weights for the MXU, (1, N) biases for the VPU add.
    w1t = jnp.asarray(w1.T)            # (12, 24)
    w2t = jnp.asarray(w2.T)            # (24, 10)
    b1_2d = b1.reshape(1, -1)          # (1, 24)
    b2_2d = b2.reshape(1, -1)          # (1, 10)

    out = fused_mlp_pallas(x, w1t, b1_2d, w2t, b2_2d)   # (32, 10)
    out = jax.block_until_ready(out)

    # Reference with the same bf16-operand / f32-accumulate contraction the
    # kernel performs (tight tolerance) ...
    ref_h = jnp.dot(x.astype(jnp.bfloat16), w1.T.astype(jnp.bfloat16),
                    preferred_element_type=jnp.float32) + b1[None, :]
    ref_out_bf16 = jnp.dot(ref_h.astype(jnp.bfloat16), w2.T.astype(jnp.bfloat16),
                           preferred_element_type=jnp.float32) + b2[None, :]
    # ... and the pure-f32 PyTorch-semantics reference (loose tolerance, since
    # MXU operands are bf16).
    ref_out_f32 = (x @ w1.T + b1[None, :]) @ w2.T + b2[None, :]

    assert out.shape == (32, 10)
    assert jnp.allclose(out, ref_out_bf16, atol=1e-4, rtol=1e-4)
    assert jnp.allclose(out, ref_out_f32, atol=2e-2, rtol=2e-2)

    print("KERNEL_OK")
</pallas_src>

<mosaic_0001>
module attributes {stable_mosaic.version = 11 : i64} {
  func.func @_fused_linear2_kernel(%arg0: memref<32x12xf32, #tpu.memory_space<vmem>>, %arg1: memref<12x24xf32, #tpu.memory_space<vmem>>, %arg2: memref<1x24xf32, #tpu.memory_space<vmem>>, %arg3: memref<24x10xf32, #tpu.memory_space<vmem>>, %arg4: memref<1x10xf32, #tpu.memory_space<vmem>>, %arg5: memref<32x10xf32, #tpu.memory_space<vmem>>) attributes {dimension_semantics = [], scalar_prefetch = 0 : i64, scratch_operands = 0 : i64, tpu.core_type = #tpu.core_type<tc>} {
    %c0 = arith.constant 0 : index
    %c0_0 = arith.constant 0 : index
    %0 = vector.load %arg0[%c0, %c0_0] : memref<32x12xf32, #tpu.memory_space<vmem>>, vector<32x12xf32>
    %1 = arith.truncf %0 : vector<32x12xf32> to vector<32x12xbf16>
    %c0_1 = arith.constant 0 : index
    %c0_2 = arith.constant 0 : index
    %2 = vector.load %arg1[%c0_1, %c0_2] : memref<12x24xf32, #tpu.memory_space<vmem>>, vector<12x24xf32>
    %3 = arith.truncf %2 : vector<12x24xf32> to vector<12x24xbf16>
    %cst = arith.constant dense<0.000000e+00> : vector<32x24xf32>
    %4 = tpu.matmul %1, %3, %cst {dimension_numbers = #tpu.dot_dimension_numbers<[1], [0], [0], [1], [0, 0, 1, 1], [], []>} : vector<32x12xbf16>, vector<12x24xbf16>, vector<32x24xf32> -> vector<32x24xf32>
    %c0_3 = arith.constant 0 : index
    %c0_4 = arith.constant 0 : index
    %5 = vector.load %arg2[%c0_3, %c0_4] : memref<1x24xf32, #tpu.memory_space<vmem>>, vector<1x24xf32>
    %6 = vector.broadcast %5 : vector<1x24xf32> to vector<32x24xf32>
    %7 = arith.addf %4, %6 : vector<32x24xf32>
    %8 = arith.truncf %7 : vector<32x24xf32> to vector<32x24xbf16>
    %c0_5 = arith.constant 0 : index
    %c0_6 = arith.constant 0 : index
    %9 = vector.load %arg3[%c0_5, %c0_6] : memref<24x10xf32, #tpu.memory_space<vmem>>, vector<24x10xf32>
    %10 = arith.truncf %9 : vector<24x10xf32> to vector<24x10xbf16>
    %cst_7 = arith.constant dense<0.000000e+00> : vector<32x10xf32>
    %11 = tpu.matmul %8, %10, %cst_7 {dimension_numbers = #tpu.dot_dimension_numbers<[1], [0], [0], [1], [0, 0, 1, 1], [], []>} : vector<32x24xbf16>, vector<24x10xbf16>, vector<32x10xf32> -> vector<32x10xf32>
    %c0_8 = arith.constant 0 : index
    %c0_9 = arith.constant 0 : index
    %12 = vector.load %arg4[%c0_8, %c0_9] : memref<1x10xf32, #tpu.memory_space<vmem>>, vector<1x10xf32>
    %13 = vector.broadcast %12 : vector<1x10xf32> to vector<32x10xf32>
    %14 = arith.addf %11, %13 : vector<32x10xf32>
    %c0_10 = arith.constant 0 : index
    %c0_11 = arith.constant 0 : index
    %15 = vector.load %arg5[%c0_10, %c0_11] : memref<32x10xf32, #tpu.memory_space<vmem>>, vector<32x10xf32>
    tpu.vector_store %arg5[%c0_10, %c0_11], %14 {strides = array<i32>} : memref<32x10xf32, #tpu.memory_space<vmem>>, vector<32x10xf32>,
    return
  }
}

</mosaic_0001>

<llo_original>
// kernel: fused_mlp_pallas.1
$region0: #{fused_mlp_pallas.1}
  #allocation0 [shape = 'u32[]', space=smem, size = 0x4, offset = 0x4, fixed_abs, tag = 'smem constant byte address 0x4 - core index']
  #allocation1 [shape = 'u32[144,128]{1,0:T(1,128)}', space=vmem, size = 0x12000, scoped, tag = 'internal scratch']
  %s0 = inlined_call_operand.vmem [shape: f32[32,12], index: 0, kind: input, shape index: {}]
  %s1 = inlined_call_operand.vmem [shape: f32[12,24], index: 1, kind: input, shape index: {}]
  %s2 = inlined_call_operand.vmem [shape: f32[1,24], index: 2, kind: input, shape index: {}]
  %s3 = inlined_call_operand.vmem [shape: f32[24,10], index: 3, kind: input, shape index: {}]
  %s4 = inlined_call_operand.vmem [shape: f32[1,10], index: 4, kind: input, shape index: {}]
  %s5 = inlined_call_operand.vmem [shape: f32[32,10], index: 5, kind: output, shape index: {}]
  %s6 = sld [smem:[#allocation0]]
  $region30: #{fused_mlp_pallas.1} parent=0
    _
  %s8 = ssub.s32 1, %s6
  %s9 = scalar_select 0, %s8, %s6
  // Predicated region
  $region2: #{fused_mlp_pallas.1} parent=0 // pred_check
    _
  $region3: #{fused_mlp_pallas.1} parent=0 // pred_check_branch
    %11 = sbr.rel (0) target = $region5
  $region4: #{fused_mlp_pallas.1} parent=0 // pred_region
    _
  $region5: #{fused_mlp_pallas.1} parent=0 // pred_fallthru
    _
  // Predicated region
  $region6: #{fused_mlp_pallas.1} parent=0 // pred_check
    _
  $region7: #{fused_mlp_pallas.1} parent=0 // pred_check_branch
    %13 = sbr.rel (0) target = $region9
  $region8: #{fused_mlp_pallas.1} parent=0 // pred_region
    _
  $region9: #{fused_mlp_pallas.1} parent=0 // pred_fallthru
    _
  // Predicated region
  $region10: #{fused_mlp_pallas.1} parent=0 // pred_check
    _
  $region11: #{fused_mlp_pallas.1} parent=0 // pred_check_branch
    %15 = sbr.rel (0) target = $region13
  $region12: #{fused_mlp_pallas.1} parent=0 // pred_region
    _
  $region13: #{fused_mlp_pallas.1} parent=0 // pred_fallthru
    _
  // Predicated region
  $region14: #{fused_mlp_pallas.1} parent=0 // pred_check
    _
  $region15: #{fused_mlp_pallas.1} parent=0 // pred_check_branch
    %17 = sbr.rel (0) target = $region17
  $region16: #{fused_mlp_pallas.1} parent=0 // pred_region
    _
  $region17: #{fused_mlp_pallas.1} parent=0 // pred_fallthru
    _
  // Predicated region
  $region18: #{fused_mlp_pallas.1} parent=0 // pred_check
    _
  $region19: #{fused_mlp_pallas.1} parent=0 // pred_check_branch
    %19 = sbr.rel (0) target = $region21
  $region20: #{fused_mlp_pallas.1} parent=0 // pred_region
    _
  $region21: #{fused_mlp_pallas.1} parent=0 // pred_fallthru
    _
  %v21 = vld [vmem:[%s0] sm:$0xff]
  %v22 = vld [vmem:[%s0 + $0x8] sm:$0xff]
  %v23 = vld [vmem:[%s0 + $0x10] sm:$0xff]
  %v24 = vld [vmem:[%s0 + $0x18] sm:$0xff]
  %v25 = vpack.c.bf16 %v22, %v21
  %v26 = vpack.c.bf16 %v24, %v23
  %v27 = vld [vmem:[%s1] sm:$0xff]
  %v28 = vld [vmem:[%s1 + $0x8] sm:$0xf]
  %v29 = vpack.c.bf16 %v28, %v27
  %v30 = vld [vmem:[%s2] sm:$0x1]
  %v32 = vlaneseq
  %v33 = vshrl.u32 %v32, 7
  %v34 = vsub.s32 0, %v33
  %v35 = vrot.slane %v30, %v34
  %vm37 = vcmask 97280
  %v39 = vsel %vm37, %v25, 0
  %v42 = vsel %vm37, %v26, 0
  %vm44 = vcmask 1045504
  %v46 = vsel %vm44, %v29, 0
  %48 = vmatprep.subr.bf16.mxu0 0
  %49 = vmatpush1.bf16.msra.mxu0 %v46
  %50 = vmatprep.subr.bf16.mxu0 0
  %51 = vmatpush1.bf16.msra.mxu0 0
  %52 = vmatprep.subr.bf16.mxu0 0
  %53 = vmatpush1.bf16.msra.mxu0 0
  %54 = vmatprep.subr.bf16.mxu0 0
  %55 = vmatpush1.bf16.msra.mxu0 0
  %56 = vmatprep.subr.bf16.mxu0 0
  %57 = vmatpush1.bf16.msra.mxu0 0
  %58 = vmatprep.subr.bf16.mxu0 0
  %59 = vmatpush1.bf16.msra.mxu0 0
  %60 = vmatprep.subr.bf16.mxu0 0
  %61 = vmatpush1.bf16.msra.mxu0 0
  %62 = vmatprep.subr.bf16.mxu0 0
  %63 = vmatpush1.bf16.msra.mxu0 0
  %64 = vmatprep.subr.bf16.mxu0 0
  %65 = vmatpush1.bf16.msra.mxu0 0
  %66 = vmatprep.subr.bf16.mxu0 0
  %67 = vmatpush1.bf16.msra.mxu0 0
  %68 = vmatprep.subr.bf16.mxu0 0
  %69 = vmatpush1.bf16.msra.mxu0 0
  %70 = vmatprep.subr.bf16.mxu0 0
  %71 = vmatpush1.bf16.msra.mxu0 0
  %72 = vmatprep.subr.bf16.mxu0 0
  %73 = vmatpush1.bf16.msra.mxu0 0
  %74 = vmatprep.subr.bf16.mxu0 0
  %75 = vmatpush1.bf16.msra.mxu0 0
  %76 = vmatprep.subr.bf16.mxu0 0
  %77 = vmatpush1.bf16.msra.mxu0 0
  %78 = vmatprep.subr.bf16.mxu0 0
  %79 = vmatpush1.bf16.msra.mxu0 0
  %80 = vmatprep.mubr.bf16.mxu0 0
  %81 = vmatmul.mubr.bf16.gmra.mrb[0].mxu0 %v39
  %v82 = vpop.f32.mrb[0].mxu0
  %v83 = vadd.f32 %v35, %v82
  %v84 = vpop.f32.mrb[0].mxu0
  %v85 = vpop.f32.mrb[0].mxu0
  %v86 = vadd.f32 %v35, %v85
  %v87 = vpop.f32.mrb[0].mxu0
  %88 = vmatprep.mubr.bf16.mxu0 0
  %89 = vmatmul.mubr.bf16.gmra.mrb[0].mxu0 %v42
  %v90 = vpop.f32.mrb[0].mxu0
  %v91 = vadd.f32 %v35, %v90
  %v92 = vpop.f32.mrb[0].mxu0
  %v93 = vpop.f32.mrb[0].mxu0
  %v94 = vadd.f32 %v35, %v93
  %v95 = vpop.f32.mrb[0].mxu0
  %96 = vdwg.mxu0
  %v97 = vpack.c.bf16 %v86, %v83
  %v98 = vpack.c.bf16 %v94, %v91
  %v99 = vld [vmem:[%s3] sm:$0xff]
  %v100 = vld [vmem:[%s3 + $0x8] sm:$0xff]
  %v101 = vld [vmem:[%s3 + $0x10] sm:$0xff]
  %v102 = vpack.c.bf16 %v100, %v99
  %v103 = vpack.c.bf16 %v101, %v101
  %v104 = vld [vmem:[%s4] sm:$0x1]
  %v106 = vlaneseq
  %v107 = vshrl.u32 %v106, 7
  %v108 = vsub.s32 0, %v107
  %v109 = vrot.slane %v104, %v108
  %vm111 = vcmask 195584
  %v113 = vsel %vm111, %v97, 0
  %v116 = vsel %vm111, %v98, 0
  %vm118 = vcmask 1043456
  %v120 = vsel %vm118, %v103, 0
  %122 = vmatprep.subr.bf16.mxu0 0
  %123 = vmatpush1.bf16.msra.mxu0 %v102
  %124 = vmatprep.subr.bf16.mxu0 0
  %125 = vmatpush1.bf16.msra.mxu0 %v120
  %126 = vmatprep.subr.bf16.mxu0 0
  %127 = vmatpush1.bf16.msra.mxu0 0
  %128 = vmatprep.subr.bf16.mxu0 0
  %129 = vmatpush1.bf16.msra.mxu0 0
  %130 = vmatprep.subr.bf16.mxu0 0
  %131 = vmatpush1.bf16.msra.mxu0 0
  %132 = vmatprep.subr.bf16.mxu0 0
  %133 = vmatpush1.bf16.msra.mxu0 0
  %134 = vmatprep.subr.bf16.mxu0 0
  %135 = vmatpush1.bf16.msra.mxu0 0
  %136 = vmatprep.subr.bf16.mxu0 0
  %137 = vmatpush1.bf16.msra.mxu0 0
  %138 = vmatprep.subr.bf16.mxu0 0
  %139 = vmatpush1.bf16.msra.mxu0 0
  %140 = vmatprep.subr.bf16.mxu0 0
  %141 = vmatpush1.bf16.msra.mxu0 0
  %142 = vmatprep.subr.bf16.mxu0 0
  %143 = vmatpush1.bf16.msra.mxu0 0
  %144 = vmatprep.subr.bf16.mxu0 0
  %145 = vmatpush1.bf16.msra.mxu0 0
  %146 = vmatprep.subr.bf16.mxu0 0
  %147 = vmatpush1.bf16.msra.mxu0 0
  %148 = vmatprep.subr.bf16.mxu0 0
  %149 = vmatpush1.bf16.msra.mxu0 0
  %150 = vmatprep.subr.bf16.mxu0 0
  %151 = vmatpush1.bf16.msra.mxu0 0
  %152 = vmatprep.subr.bf16.mxu0 0
  %153 = vmatpush1.bf16.msra.mxu0 0
  %154 = vmatprep.mubr.bf16.mxu0 0
  %155 = vmatmul.mubr.bf16.gmra.mrb[0].mxu0 %v113
  %v156 = vpop.f32.mrb[0].mxu0
  %v157 = vadd.f32 %v109, %v156
  %v158 = vpop.f32.mrb[0].mxu0
  %v159 = vpop.f32.mrb[0].mxu0
  %v160 = vadd.f32 %v109, %v159
  %v161 = vpop.f32.mrb[0].mxu0
  %162 = vmatprep.mubr.bf16.mxu0 0
  %163 = vmatmul.mubr.bf16.gmra.mrb[0].mxu0 %v116
  %v164 = vpop.f32.mrb[0].mxu0
  %v165 = vadd.f32 %v109, %v164
  %v166 = vpop.f32.mrb[0].mxu0
  %v167 = vpop.f32.mrb[0].mxu0
  %v168 = vadd.f32 %v109, %v167
  %v169 = vpop.f32.mrb[0].mxu0
  %170 = vdwg.mxu0
  %vm171 = vcmask 80896
  %172 = vst.msk [vmem:[%s5] sm:$0xff] %vm171, %v157
  %173 = vst.msk [vmem:[%s5 + $0x8] sm:$0xff] %vm171, %v160
  %174 = vst.msk [vmem:[%s5 + $0x10] sm:$0xff] %vm171, %v165
  %175 = vst.msk [vmem:[%s5 + $0x18] sm:$0xff] %vm171, %v168
  // Predicated region
  $region22: #{fused_mlp_pallas.1} parent=0 // pred_check
    _
  $region23: #{fused_mlp_pallas.1} parent=0 // pred_check_branch
    %177 = sbr.rel (0) target = $region25
  $region24: #{fused_mlp_pallas.1} parent=0 // pred_region
    _
  $region25: #{fused_mlp_pallas.1} parent=0 // pred_fallthru
    _
  // Predicated region
  $region26: #{fused_mlp_pallas.1} parent=0 // pred_check
    _
  $region27: #{fused_mlp_pallas.1} parent=0 // pred_check_branch
    %179 = sbr.rel (0) target = $region29
  $region28: #{fused_mlp_pallas.1} parent=0 // pred_region
    _
  $region29: #{fused_mlp_pallas.1} parent=0 // pred_fallthru
    _

</llo_original>
